<compile_context>
chip_gen: v6e
topology: v6e:2x2x1
jax: 0.10.0
libtpu: 0.0.40
codegen_flags: <defaults>
</compile_context>

<pallas_src>
import jax
import jax.numpy as jnp
from jax.experimental import pallas as pl
from jax.experimental.pallas import tpu as pltpu


def _round_up(n, m):
    return (n + m - 1) // m * m


# ---------------------------------------------------------------------------
# Kernel: one (tile_b, in_dim) batch tile, all parameters resident in VMEM.
# ---------------------------------------------------------------------------
def _dqn_kernel(x_ref, w1_ref, b1_ref, w2_ref, b2_ref, w3_ref, b3_ref, o_ref):
    cdt = w1_ref.dtype                       # MXU operand dtype (bf16 or f32)
    x = x_ref[...].astype(cdt)               # in-kernel cast: free under DMA slack

    h = jnp.dot(x, w1_ref[...], preferred_element_type=jnp.float32) + b1_ref[...]
    h = jnp.maximum(h, 0.0)                  # f32 epilogue

    h = jnp.dot(h.astype(cdt), w2_ref[...], preferred_element_type=jnp.float32) + b2_ref[...]
    h = jnp.maximum(h, 0.0)

    out = jnp.dot(h.astype(cdt), w3_ref[...], preferred_element_type=jnp.float32) + b3_ref[...]
    o_ref[...] = out.astype(o_ref.dtype)     # (tile_b, out_dim) store; OOB rows masked


# ---------------------------------------------------------------------------
# One-time parameter prep (hoisted out of the per-step forward).
# ---------------------------------------------------------------------------
def prepare_params(params, compute_dtype=jnp.bfloat16):
    """Cast weights to the MXU operand dtype once; biases stay f32 (epilogue).
    Weights are stored as (in_features, out_features)."""
    return (
        params["w1"].astype(compute_dtype), params["b1"].reshape(1, -1).astype(jnp.float32),
        params["w2"].astype(compute_dtype), params["b2"].reshape(1, -1).astype(jnp.float32),
        params["w3"].astype(compute_dtype), params["b3"].reshape(1, -1).astype(jnp.float32),
    )


def dqn_forward(x, prepared, *, tile_b=2048):
    """x: (B, input_dim).  prepared: output of prepare_params().
    Pass x as bf16 upstream to additionally halve the dominant DMA read bytes."""
    w1, b1, w2, b2, w3, b3 = prepared
    B, in_dim = x.shape
    out_dim = w3.shape[1]

    # Sublane alignment of the batch tile: 16 for sub-32-bit operands, else 8.
    align = 8 * (4 // jnp.dtype(w1.dtype).itemsize)
    tb = min(tile_b, _round_up(B, align))
    # v7x megacore: guarantee >= 2 grid steps for non-trivial batches so the
    # "parallel" batch axis actually shards across both TensorCores.
    if B > 2 * align:
        tb = min(tb, _round_up(pl.cdiv(B, 2), align))

    grid = (pl.cdiv(B, tb),)
    resident = lambda a: pl.BlockSpec(a.shape, lambda i: (0, 0))  # VMEM-resident

    return pl.pallas_call(
        _dqn_kernel,
        out_shape=jax.ShapeDtypeStruct((B, out_dim), jnp.float32),
        grid=grid,
        in_specs=[
            pl.BlockSpec((tb, in_dim), lambda i: (i, 0)),   # streamed x tiles
            resident(w1), resident(b1),
            resident(w2), resident(b2),
            resident(w3), resident(b3),
        ],
        out_specs=pl.BlockSpec((tb, out_dim), lambda i: (i, 0)),
        compiler_params=pltpu.CompilerParams(
            dimension_semantics=("parallel",),               # megacore on v7x
        ),
    )(x, w1, b1, w2, b2, w3, b3)


# ---------------------------------------------------------------------------
# Init + pure-JAX reference (mirror of the PyTorch module).
# ---------------------------------------------------------------------------
def init_params(key, input_dim, output_dim, hidden=64):
    """nn.Linear-style init (uniform +-1/sqrt(fan_in)); weights as (in, out)."""
    ks = jax.random.split(key, 6)

    def lin(kw, kb, fan_in, fan_out):
        bound = 1.0 / jnp.sqrt(jnp.float32(fan_in))
        w = jax.random.uniform(kw, (fan_in, fan_out), jnp.float32, -bound, bound)
        b = jax.random.uniform(kb, (1, fan_out), jnp.float32, -bound, bound)
        return w, b

    w1, b1 = lin(ks[0], ks[1], input_dim, hidden)
    w2, b2 = lin(ks[2], ks[3], hidden, hidden)
    w3, b3 = lin(ks[4], ks[5], hidden, output_dim)
    return {"w1": w1, "b1": b1, "w2": w2, "b2": b2, "w3": w3, "b3": b3}


def dqn_reference(x, params):
    h = jnp.maximum(x @ params["w1"] + params["b1"], 0.0)
    h = jnp.maximum(h @ params["w2"] + params["b2"], 0.0)
    return h @ params["w3"] + params["b3"]


if __name__ == "__main__":
    key = jax.random.PRNGKey(0)
    k_x, k_p, k_x2 = jax.random.split(key, 3)

    input_dim, output_dim = 32, 8
    params = init_params(k_p, input_dim, output_dim)
    prepared_f32 = prepare_params(params, compute_dtype=jnp.float32)
    prepared_bf16 = prepare_params(params)                       # bf16 default

    # Small batch (RL acting step): single tile, f32 operands, strict tolerance.
    x_small = jax.random.normal(k_x, (8, input_dim), jnp.float32)
    out_small = jax.block_until_ready(dqn_forward(x_small, prepared_f32))
    ref_small = dqn_reference(x_small, params)
    assert out_small.shape == (8, output_dim)
    assert jnp.allclose(out_small, ref_small, atol=1e-5, rtol=1e-5)

    # Non-multiple batch: exercises the cdiv grid (2 tiles), ragged final
    # block masking, and the resident-weight path.
    x_big = jax.random.normal(k_x2, (300, input_dim), jnp.float32)
    out_big = jax.block_until_ready(dqn_forward(x_big, prepared_f32))
    ref_big = dqn_reference(x_big, params)
    assert out_big.shape == (300, output_dim)
    assert jnp.allclose(out_big, ref_big, atol=1e-5, rtol=1e-5)

    # bf16 MXU operand fast path (default); f32 accumulation + epilogue, so
    # tolerance is only modestly relaxed.
    out_bf16 = jax.block_until_ready(dqn_forward(x_big, prepared_bf16))
    assert out_bf16.shape == (300, output_dim)
    assert jnp.allclose(out_bf16, ref_big, atol=5e-2, rtol=5e-2)

    print("KERNEL_OK")
</pallas_src>

<mosaic_0001>
module attributes {stable_mosaic.version = 11 : i64} {
  func.func @_dqn_kernel(%arg0: i32, %arg1: memref<8x32xf32, #tpu.memory_space<vmem>>, %arg2: memref<32x64xf32, #tpu.memory_space<vmem>>, %arg3: memref<1x64xf32, #tpu.memory_space<vmem>>, %arg4: memref<64x64xf32, #tpu.memory_space<vmem>>, %arg5: memref<1x64xf32, #tpu.memory_space<vmem>>, %arg6: memref<64x8xf32, #tpu.memory_space<vmem>>, %arg7: memref<1x8xf32, #tpu.memory_space<vmem>>, %arg8: memref<8x8xf32, #tpu.memory_space<vmem>>) attributes {dimension_semantics = [#tpu.dimension_semantics<parallel>], iteration_bounds = array<i64: 1>, scalar_prefetch = 0 : i64, scratch_operands = 0 : i64, tpu.core_type = #tpu.core_type<tc>, window_params = [{transform_indices = @transform_0, window_bounds = array<i64: 8, 32>}, {pipeline_mode = #tpu.pipeline_mode<synchronous>, transform_indices = @transform_1, window_bounds = array<i64: 32, 64>}, {pipeline_mode = #tpu.pipeline_mode<synchronous>, transform_indices = @transform_2, window_bounds = array<i64: 1, 64>}, {pipeline_mode = #tpu.pipeline_mode<synchronous>, transform_indices = @transform_3, window_bounds = array<i64: 64, 64>}, {pipeline_mode = #tpu.pipeline_mode<synchronous>, transform_indices = @transform_4, window_bounds = array<i64: 1, 64>}, {pipeline_mode = #tpu.pipeline_mode<synchronous>, transform_indices = @transform_5, window_bounds = array<i64: 64, 8>}, {pipeline_mode = #tpu.pipeline_mode<synchronous>, transform_indices = @transform_6, window_bounds = array<i64: 1, 8>}, {transform_indices = @transform_7, window_bounds = array<i64: 8, 8>}]} {
    %c0 = arith.constant 0 : index
    %c0_0 = arith.constant 0 : index
    %0 = vector.load %arg1[%c0, %c0_0] : memref<8x32xf32, #tpu.memory_space<vmem>>, vector<8x32xf32>
    %c0_1 = arith.constant 0 : index
    %c0_2 = arith.constant 0 : index
    %1 = vector.load %arg2[%c0_1, %c0_2] : memref<32x64xf32, #tpu.memory_space<vmem>>, vector<32x64xf32>
    %cst = arith.constant dense<0.000000e+00> : vector<8x64xf32>
    %2 = tpu.matmul %0, %1, %cst {dimension_numbers = #tpu.dot_dimension_numbers<[1], [0], [0], [1], [0, 0, 1, 1], [], []>} : vector<8x32xf32>, vector<32x64xf32>, vector<8x64xf32> -> vector<8x64xf32>
    %c0_3 = arith.constant 0 : index
    %c0_4 = arith.constant 0 : index
    %3 = vector.load %arg3[%c0_3, %c0_4] : memref<1x64xf32, #tpu.memory_space<vmem>>, vector<1x64xf32>
    %4 = vector.broadcast %3 : vector<1x64xf32> to vector<8x64xf32>
    %5 = arith.addf %2, %4 : vector<8x64xf32>
    %cst_5 = arith.constant 0.000000e+00 : f32
    %6 = vector.broadcast %cst_5 : f32 to vector<8x64xf32>
    %7 = arith.maximumf %5, %6 : vector<8x64xf32>
    %c0_6 = arith.constant 0 : index
    %c0_7 = arith.constant 0 : index
    %8 = vector.load %arg4[%c0_6, %c0_7] : memref<64x64xf32, #tpu.memory_space<vmem>>, vector<64x64xf32>
    %cst_8 = arith.constant dense<0.000000e+00> : vector<8x64xf32>
    %9 = tpu.matmul %7, %8, %cst_8 {dimension_numbers = #tpu.dot_dimension_numbers<[1], [0], [0], [1], [0, 0, 1, 1], [], []>} : vector<8x64xf32>, vector<64x64xf32>, vector<8x64xf32> -> vector<8x64xf32>
    %c0_9 = arith.constant 0 : index
    %c0_10 = arith.constant 0 : index
    %10 = vector.load %arg5[%c0_9, %c0_10] : memref<1x64xf32, #tpu.memory_space<vmem>>, vector<1x64xf32>
    %11 = vector.broadcast %10 : vector<1x64xf32> to vector<8x64xf32>
    %12 = arith.addf %9, %11 : vector<8x64xf32>
    %cst_11 = arith.constant 0.000000e+00 : f32
    %13 = vector.broadcast %cst_11 : f32 to vector<8x64xf32>
    %14 = arith.maximumf %12, %13 : vector<8x64xf32>
    %c0_12 = arith.constant 0 : index
    %c0_13 = arith.constant 0 : index
    %15 = vector.load %arg6[%c0_12, %c0_13] : memref<64x8xf32, #tpu.memory_space<vmem>>, vector<64x8xf32>
    %cst_14 = arith.constant dense<0.000000e+00> : vector<8x8xf32>
    %16 = tpu.matmul %14, %15, %cst_14 {dimension_numbers = #tpu.dot_dimension_numbers<[1], [0], [0], [1], [0, 0, 1, 1], [], []>} : vector<8x64xf32>, vector<64x8xf32>, vector<8x8xf32> -> vector<8x8xf32>
    %c0_15 = arith.constant 0 : index
    %c0_16 = arith.constant 0 : index
    %17 = vector.load %arg7[%c0_15, %c0_16] : memref<1x8xf32, #tpu.memory_space<vmem>>, vector<1x8xf32>
    %18 = vector.broadcast %17 : vector<1x8xf32> to vector<8x8xf32>
    %19 = arith.addf %16, %18 : vector<8x8xf32>
    %c0_17 = arith.constant 0 : index
    %c0_18 = arith.constant 0 : index
    %20 = vector.load %arg8[%c0_17, %c0_18] : memref<8x8xf32, #tpu.memory_space<vmem>>, vector<8x8xf32>
    tpu.vector_store %arg8[%c0_17, %c0_18], %19 {strides = array<i32>} : memref<8x8xf32, #tpu.memory_space<vmem>>, vector<8x8xf32>,
    return
  }
  func.func @transform_0(%arg0: i32) -> (i32, i32) {
    %c0_i32 = arith.constant 0 : i32
    %c0_i32_0 = arith.constant 0 : i32
    return %arg0, %c0_i32 : i32, i32
  }
  func.func @transform_1(%arg0: i32) -> (i32, i32) {
    %c0_i32 = arith.constant 0 : i32
    %c0_i32_0 = arith.constant 0 : i32
    %c0_i32_1 = arith.constant 0 : i32
    return %c0_i32, %c0_i32_0 : i32, i32
  }
  func.func @transform_2(%arg0: i32) -> (i32, i32) {
    %c0_i32 = arith.constant 0 : i32
    %c0_i32_0 = arith.constant 0 : i32
    %c0_i32_1 = arith.constant 0 : i32
    return %c0_i32, %c0_i32_0 : i32, i32
  }
  func.func @transform_3(%arg0: i32) -> (i32, i32) {
    %c0_i32 = arith.constant 0 : i32
    %c0_i32_0 = arith.constant 0 : i32
    %c0_i32_1 = arith.constant 0 : i32
    return %c0_i32, %c0_i32_0 : i32, i32
  }
  func.func @transform_4(%arg0: i32) -> (i32, i32) {
    %c0_i32 = arith.constant 0 : i32
    %c0_i32_0 = arith.constant 0 : i32
    %c0_i32_1 = arith.constant 0 : i32
    return %c0_i32, %c0_i32_0 : i32, i32
  }
  func.func @transform_5(%arg0: i32) -> (i32, i32) {
    %c0_i32 = arith.constant 0 : i32
    %c0_i32_0 = arith.constant 0 : i32
    %c0_i32_1 = arith.constant 0 : i32
    return %c0_i32, %c0_i32_0 : i32, i32
  }
  func.func @transform_6(%arg0: i32) -> (i32, i32) {
    %c0_i32 = arith.constant 0 : i32
    %c0_i32_0 = arith.constant 0 : i32
    %c0_i32_1 = arith.constant 0 : i32
    return %c0_i32, %c0_i32_0 : i32, i32
  }
  func.func @transform_7(%arg0: i32) -> (i32, i32) {
    %c0_i32 = arith.constant 0 : i32
    %c0_i32_0 = arith.constant 0 : i32
    return %arg0, %c0_i32 : i32, i32
  }
}

</mosaic_0001>

<llo_original>
// kernel: tpu_custom_call.1
$region0: #{tpu_custom_call.1}
  #allocation0 [shape = 'u32[]', space=smem, size = 0x4, offset = 0x4, fixed_abs, tag = 'smem constant byte address 0x4 - core index']
  #allocation1 [shape = 'u32[144,128]{1,0:T(1,128)}', space=vmem, size = 0x12000, scoped, tag = 'internal scratch']
  %s0 = inlined_call_operand.vmem [shape: f32[8,32], index: 0, kind: input, shape index: {}]
  %s1 = inlined_call_operand.hbm [shape: f32[32,64], index: 1, kind: input, shape index: {}]
  %s2 = inlined_call_operand.vmem [shape: f32[1,64], index: 2, kind: input, shape index: {}]
  %s3 = inlined_call_operand.vmem [shape: f32[64,64], index: 3, kind: input, shape index: {}]
  %s4 = inlined_call_operand.hbm [shape: f32[1,64], index: 4, kind: input, shape index: {}]
  %s5 = inlined_call_operand.vmem [shape: f32[64,8], index: 5, kind: input, shape index: {}]
  %s6 = inlined_call_operand.vmem [shape: f32[1,8], index: 6, kind: input, shape index: {}]
  %s7 = inlined_call_operand.hbm [shape: f32[8,8], index: 7, kind: output, shape index: {}]
  %s8 = sld [smem:[#allocation0]]
  $region46: #{tpu_custom_call.1} parent=0
    _
  %s10 = ssub.s32 1, %s8
  %s11 = scalar_select 0, %s10, %s8
  $region1: #{tpu_custom_call.1} parent=0
    #allocation2 [shape = 'u8[16384]{0}', space=vmem, size = 0x4000, scoped, tag = 'input window, operand 1, single buffered']
    #allocation3 [shape = 's32[1]{0}', space=sflag, size = 0x4, scoped, tag = 'scoped memory for tpu_custom_call.1']
    #allocation4 [shape = 's32[1]{0}', space=sflag, size = 0x4, scoped, tag = 'scoped memory for tpu_custom_call.1']
    #allocation5 [shape = 'u8[512]{0}', space=vmem, size = 0x400, scoped, tag = 'input window, operand 4, single buffered']
    #allocation6 [shape = 's32[1]{0}', space=sflag, size = 0x4, scoped, tag = 'scoped memory for tpu_custom_call.1']
    #allocation7 [shape = 'u8[4096]{0}', space=vmem, size = 0x1000, scoped, tag = 'output window, operand 0, single buffered']
    %12 = vsyncpa [#allocation3], 0
    %13 = vsyncpa [#allocation6], 0
    %14 = vsyncpa [#allocation4], 0
    // Predicated region
    $region2: #{tpu_custom_call.1} parent=1 // pred_check
      _
    $region3: #{tpu_custom_call.1} parent=1 // pred_check_branch
      %16 = sbr.rel (0) target = $region5
    $region4: #{tpu_custom_call.1} parent=1 // pred_region
      _
    $region5: #{tpu_custom_call.1} parent=1 // pred_fallthru
      _
    // Predicated region
    $region6: #{tpu_custom_call.1} parent=1 // pred_check
      _
    $region7: #{tpu_custom_call.1} parent=1 // pred_check_branch
      %18 = sbr.rel (0) target = $region9
    $region8: #{tpu_custom_call.1} parent=1 // pred_region
      %s20 = ssub.s32 512, 512
      %21 = vsyncadd [#allocation3], %s20
      %s22 = sshll.u32 [#allocation2], 4
      %s23 = int_to_ptr.vmem [resolvable:$true] %s22
      %28 = dma.hbm_to_vmem [thread:$0]  %s1, 512, %s23, [#allocation3], 128, 128, 8
    $region9: #{tpu_custom_call.1} parent=1 // pred_fallthru
      _
    // Predicated region
    $region10: #{tpu_custom_call.1} parent=1 // pred_check
      _
    $region11: #{tpu_custom_call.1} parent=1 // pred_check_branch
      %30 = sbr.rel (0) target = $region13
    $region12: #{tpu_custom_call.1} parent=1 // pred_region
      _
    $region13: #{tpu_custom_call.1} parent=1 // pred_fallthru
      _
    // Predicated region
    $region14: #{tpu_custom_call.1} parent=1 // pred_check
      _
    $region15: #{tpu_custom_call.1} parent=1 // pred_check_branch
      %32 = sbr.rel (0) target = $region17
    $region16: #{tpu_custom_call.1} parent=1 // pred_region
      _
    $region17: #{tpu_custom_call.1} parent=1 // pred_fallthru
      _
    // Predicated region
    $region18: #{tpu_custom_call.1} parent=1 // pred_check
      _
    $region19: #{tpu_custom_call.1} parent=1 // pred_check_branch
      %34 = sbr.rel (0) target = $region21
    $region20: #{tpu_custom_call.1} parent=1 // pred_region
      %s36 = ssub.s32 16, 16
      %37 = vsyncadd [#allocation6], %s36
      %s39 = sshll.u32 [#allocation5], 4
      %s40 = int_to_ptr.vmem [resolvable:$true] %s39
      %42 = dma.hbm_to_vmem [thread:$0]  %s4, 16, %s40, [#allocation6]
    $region21: #{tpu_custom_call.1} parent=1 // pred_fallthru
      _
    // Predicated region
    $region22: #{tpu_custom_call.1} parent=1 // pred_check
      _
    $region23: #{tpu_custom_call.1} parent=1 // pred_check_branch
      %44 = sbr.rel (0) target = $region25
    $region24: #{tpu_custom_call.1} parent=1 // pred_region
      _
    $region25: #{tpu_custom_call.1} parent=1 // pred_fallthru
      _
    // Predicated region
    $region26: #{tpu_custom_call.1} parent=1 // pred_check
      _
    $region27: #{tpu_custom_call.1} parent=1 // pred_check_branch
      %46 = sbr.rel (0) target = $region29
    $region28: #{tpu_custom_call.1} parent=1 // pred_region
      _
    $region29: #{tpu_custom_call.1} parent=1 // pred_fallthru
      _
    // Predicated region
    $region30: #{tpu_custom_call.1} parent=1 // pred_check
      _
    $region31: #{tpu_custom_call.1} parent=1 // pred_check_branch
      %48 = sbr.rel (0) target = $region33
    $region32: #{tpu_custom_call.1} parent=1 // pred_region
      %49 = dma.done [#allocation3], 512
    $region33: #{tpu_custom_call.1} parent=1 // pred_fallthru
      _
    // Predicated region
    $region34: #{tpu_custom_call.1} parent=1 // pred_check
      _
    $region35: #{tpu_custom_call.1} parent=1 // pred_check_branch
      %51 = sbr.rel (0) target = $region37
    $region36: #{tpu_custom_call.1} parent=1 // pred_region
      %52 = dma.done [#allocation6], 16
    $region37: #{tpu_custom_call.1} parent=1 // pred_fallthru
      _
    %v53 = vld [vmem:[%s0] sm:$0xff]
    %v54 = vld [vmem:[#allocation2] sm:$0xff]
    %v55 = vld [vmem:[#allocation2 + $0x8] sm:$0xff]
    %v56 = vld [vmem:[#allocation2 + $0x10] sm:$0xff]
    %v57 = vld [vmem:[#allocation2 + $0x18] sm:$0xff]
    %v58 = vld [vmem:[%s2] sm:$0x1]
    %v60 = vlaneseq
    %v61 = vshrl.u32 %v60, 7
    %v62 = vsub.s32 0, %v61
    %v63 = vrot.slane %v58, %v62
    %vm65 = vcmask 261120
    %v67 = vsel %vm65, %v53, 0
    %69 = vmatprep.subr.mxu0 0.0
    %70 = vmatpush1.msra.mxu0 0.0
    %71 = vmatprep.subr.mxu0 0.0
    %72 = vmatpush1.msra.mxu0 0.0
    %73 = vmatprep.subr.mxu0 0.0
    %74 = vmatpush1.msra.mxu0 0.0
    %75 = vmatprep.subr.mxu0 0.0
    %76 = vmatpush1.msra.mxu0 0.0
    %77 = vmatprep.subr.mxu0 0.0
    %78 = vmatpush1.msra.mxu0 0.0
    %79 = vmatprep.subr.mxu0 0.0
    %80 = vmatpush1.msra.mxu0 0.0
    %81 = vmatprep.subr.mxu0 0.0
    %82 = vmatpush1.msra.mxu0 0.0
    %83 = vmatprep.subr.mxu0 0.0
    %84 = vmatpush1.msra.mxu0 0.0
    %85 = vmatprep.subr.mxu0 0.0
    %86 = vmatpush1.msra.mxu0 0.0
    %87 = vmatprep.subr.mxu0 0.0
    %88 = vmatpush1.msra.mxu0 0.0
    %89 = vmatprep.subr.mxu0 0.0
    %90 = vmatpush1.msra.mxu0 0.0
    %91 = vmatprep.subr.mxu0 0.0
    %92 = vmatpush1.msra.mxu0 0.0
    %93 = vmatprep.subr.mxu0 0.0
    %94 = vmatpush1.msra.mxu0 %v57
    %95 = vmatprep.subr.mxu0 0.0
    %96 = vmatpush1.msra.mxu0 %v56
    %97 = vmatprep.subr.mxu0 0.0
    %98 = vmatpush1.msra.mxu0 %v55
    %99 = vmatprep.subr.mxu0 0.0
    %100 = vmatpush1.msra.mxu0 %v54
    %101 = vmatprep.subr.mxu0 0.0
    %102 = vmatpush2.msra.mxu0 0.0
    %103 = vmatprep.subr.mxu0 0.0
    %104 = vmatpush2.msra.mxu0 0.0
    %105 = vmatprep.subr.mxu0 0.0
    %106 = vmatpush2.msra.mxu0 0.0
    %107 = vmatprep.subr.mxu0 0.0
    %108 = vmatpush2.msra.mxu0 0.0
    %109 = vmatprep.subr.mxu0 0.0
    %110 = vmatpush2.msra.mxu0 0.0
    %111 = vmatprep.subr.mxu0 0.0
    %112 = vmatpush2.msra.mxu0 0.0
    %113 = vmatprep.subr.mxu0 0.0
    %114 = vmatpush2.msra.mxu0 0.0
    %115 = vmatprep.subr.mxu0 0.0
    %116 = vmatpush2.msra.mxu0 0.0
    %117 = vmatprep.subr.mxu0 0.0
    %118 = vmatpush2.msra.mxu0 0.0
    %119 = vmatprep.subr.mxu0 0.0
    %120 = vmatpush2.msra.mxu0 0.0
    %121 = vmatprep.subr.mxu0 0.0
    %122 = vmatpush2.msra.mxu0 0.0
    %123 = vmatprep.subr.mxu0 0.0
    %124 = vmatpush2.msra.mxu0 0.0
    %125 = vmatprep.subr.mxu0 0.0
    %126 = vmatpush2.msra.mxu0 0.0
    %127 = vmatprep.subr.mxu0 0.0
    %128 = vmatpush2.msra.mxu0 0.0
    %129 = vmatprep.subr.mxu0 0.0
    %130 = vmatpush2.msra.mxu0 0.0
    %131 = vmatprep.subr.mxu0 0.0
    %132 = vmatpush2.msra.mxu0 0.0
    %133 = vmatprep.mubr.f32.mxu0 0.0
    %134 = vmatmul.mubr.f32.gmra.mxu0 %v67
    %v135 = vpop.f32.mrf.mxu0
    %v136 = vadd.f32 %v63, %v135
    %v137 = vpop.f32.mrf.mxu0
    %138 = vdwg.mxu0
    %v139 = vmax.f32 %v136, 0.0
    %v140 = vld [vmem:[%s3] sm:$0xff]
    %v141 = vld [vmem:[%s3 + $0x8] sm:$0xff]
    %v142 = vld [vmem:[%s3 + $0x10] sm:$0xff]
    %v143 = vld [vmem:[%s3 + $0x18] sm:$0xff]
    %v144 = vld [vmem:[%s3 + $0x20] sm:$0xff]
    %v145 = vld [vmem:[%s3 + $0x28] sm:$0xff]
    %v146 = vld [vmem:[%s3 + $0x30] sm:$0xff]
    %v147 = vld [vmem:[%s3 + $0x38] sm:$0xff]
    %v148 = vld [vmem:[#allocation5] sm:$0x1]
    %v150 = vlaneseq
    %v151 = vshrl.u32 %v150, 7
    %v152 = vsub.s32 0, %v151
    %v153 = vrot.slane %v148, %v152
    %vm155 = vcmask 523264
    %v157 = vsel %vm155, %v139, 0
    %159 = vmatprep.subr.mxu0 0.0
    %160 = vmatpush1.msra.mxu0 0.0
    %161 = vmatprep.subr.mxu0 0.0
    %162 = vmatpush1.msra.mxu0 0.0
    %163 = vmatprep.subr.mxu0 0.0
    %164 = vmatpush1.msra.mxu0 0.0
    %165 = vmatprep.subr.mxu0 0.0
    %166 = vmatpush1.msra.mxu0 0.0
    %167 = vmatprep.subr.mxu0 0.0
    %168 = vmatpush1.msra.mxu0 0.0
    %169 = vmatprep.subr.mxu0 0.0
    %170 = vmatpush1.msra.mxu0 0.0
    %171 = vmatprep.subr.mxu0 0.0
    %172 = vmatpush1.msra.mxu0 0.0
    %173 = vmatprep.subr.mxu0 0.0
    %174 = vmatpush1.msra.mxu0 0.0
    %175 = vmatprep.subr.mxu0 0.0
    %176 = vmatpush1.msra.mxu0 %v147
    %177 = vmatprep.subr.mxu0 0.0
    %178 = vmatpush1.msra.mxu0 %v146
    %179 = vmatprep.subr.mxu0 0.0
    %180 = vmatpush1.msra.mxu0 %v145
    %181 = vmatprep.subr.mxu0 0.0
    %182 = vmatpush1.msra.mxu0 %v144
    %183 = vmatprep.subr.mxu0 0.0
    %184 = vmatpush1.msra.mxu0 %v143
    %185 = vmatprep.subr.mxu0 0.0
    %186 = vmatpush1.msra.mxu0 %v142
    %187 = vmatprep.subr.mxu0 0.0
    %188 = vmatpush1.msra.mxu0 %v141
    %189 = vmatprep.subr.mxu0 0.0
    %190 = vmatpush1.msra.mxu0 %v140
    %191 = vmatprep.subr.mxu0 0.0
    %192 = vmatpush2.msra.mxu0 0.0
    %193 = vmatprep.subr.mxu0 0.0
    %194 = vmatpush2.msra.mxu0 0.0
    %195 = vmatprep.subr.mxu0 0.0
    %196 = vmatpush2.msra.mxu0 0.0
    %197 = vmatprep.subr.mxu0 0.0
    %198 = vmatpush2.msra.mxu0 0.0
    %199 = vmatprep.subr.mxu0 0.0
    %200 = vmatpush2.msra.mxu0 0.0
    %201 = vmatprep.subr.mxu0 0.0
    %202 = vmatpush2.msra.mxu0 0.0
    %203 = vmatprep.subr.mxu0 0.0
    %204 = vmatpush2.msra.mxu0 0.0
    %205 = vmatprep.subr.mxu0 0.0
    %206 = vmatpush2.msra.mxu0 0.0
    %207 = vmatprep.subr.mxu0 0.0
    %208 = vmatpush2.msra.mxu0 0.0
    %209 = vmatprep.subr.mxu0 0.0
    %210 = vmatpush2.msra.mxu0 0.0
    %211 = vmatprep.subr.mxu0 0.0
    %212 = vmatpush2.msra.mxu0 0.0
    %213 = vmatprep.subr.mxu0 0.0
    %214 = vmatpush2.msra.mxu0 0.0
    %215 = vmatprep.subr.mxu0 0.0
    %216 = vmatpush2.msra.mxu0 0.0
    %217 = vmatprep.subr.mxu0 0.0
    %218 = vmatpush2.msra.mxu0 0.0
    %219 = vmatprep.subr.mxu0 0.0
    %220 = vmatpush2.msra.mxu0 0.0
    %221 = vmatprep.subr.mxu0 0.0
    %222 = vmatpush2.msra.mxu0 0.0
    %223 = vmatprep.mubr.f32.mxu0 0.0
    %224 = vmatmul.mubr.f32.gmra.mxu0 %v157
    %v225 = vpop.f32.mrf.mxu0
    %v226 = vadd.f32 %v153, %v225
    %v227 = vpop.f32.mrf.mxu0
    %228 = vdwg.mxu0
    %v229 = vmax.f32 %v226, 0.0
    %v230 = vld [vmem:[%s5] sm:$0xff]
    %v231 = vld [vmem:[%s5 + $0x8] sm:$0xff]
    %v232 = vld [vmem:[%s5 + $0x10] sm:$0xff]
    %v233 = vld [vmem:[%s5 + $0x18] sm:$0xff]
    %v234 = vld [vmem:[%s5 + $0x20] sm:$0xff]
    %v235 = vld [vmem:[%s5 + $0x28] sm:$0xff]
    %v236 = vld [vmem:[%s5 + $0x30] sm:$0xff]
    %v237 = vld [vmem:[%s5 + $0x38] sm:$0xff]
    %v238 = vld [vmem:[%s6] sm:$0x1]
    %v240 = vlaneseq
    %v241 = vshrl.u32 %v240, 7
    %v242 = vsub.s32 0, %v241
    %v243 = vrot.slane %v238, %v242
    %v246 = vsel %vm155, %v229, 0
    %248 = vmatprep.subr.mxu0 0.0
    %249 = vmatpush1.msra.mxu0 0.0
    %250 = vmatprep.subr.mxu0 0.0
    %251 = vmatpush1.msra.mxu0 0.0
    %252 = vmatprep.subr.mxu0 0.0
    %253 = vmatpush1.msra.mxu0 0.0
    %254 = vmatprep.subr.mxu0 0.0
    %255 = vmatpush1.msra.mxu0 0.0
    %256 = vmatprep.subr.mxu0 0.0
    %257 = vmatpush1.msra.mxu0 0.0
    %258 = vmatprep.subr.mxu0 0.0
    %259 = vmatpush1.msra.mxu0 0.0
    %260 = vmatprep.subr.mxu0 0.0
    %261 = vmatpush1.msra.mxu0 0.0
    %262 = vmatprep.subr.mxu0 0.0
    %263 = vmatpush1.msra.mxu0 0.0
    %264 = vmatprep.subr.mxu0 0.0
    %265 = vmatpush1.msra.mxu0 %v237
    %266 = vmatprep.subr.mxu0 0.0
    %267 = vmatpush1.msra.mxu0 %v236
    %268 = vmatprep.subr.mxu0 0.0
    %269 = vmatpush1.msra.mxu0 %v235
    %270 = vmatprep.subr.mxu0 0.0
    %271 = vmatpush1.msra.mxu0 %v234
    %272 = vmatprep.subr.mxu0 0.0
    %273 = vmatpush1.msra.mxu0 %v233
    %274 = vmatprep.subr.mxu0 0.0
    %275 = vmatpush1.msra.mxu0 %v232
    %276 = vmatprep.subr.mxu0 0.0
    %277 = vmatpush1.msra.mxu0 %v231
    %278 = vmatprep.subr.mxu0 0.0
    %279 = vmatpush1.msra.mxu0 %v230
    %280 = vmatprep.subr.mxu0 0.0
    %281 = vmatpush2.msra.mxu0 0.0
    %282 = vmatprep.subr.mxu0 0.0
    %283 = vmatpush2.msra.mxu0 0.0
    %284 = vmatprep.subr.mxu0 0.0
    %285 = vmatpush2.msra.mxu0 0.0
    %286 = vmatprep.subr.mxu0 0.0
    %287 = vmatpush2.msra.mxu0 0.0
    %288 = vmatprep.subr.mxu0 0.0
    %289 = vmatpush2.msra.mxu0 0.0
    %290 = vmatprep.subr.mxu0 0.0
    %291 = vmatpush2.msra.mxu0 0.0
    %292 = vmatprep.subr.mxu0 0.0
    %293 = vmatpush2.msra.mxu0 0.0
    %294 = vmatprep.subr.mxu0 0.0
    %295 = vmatpush2.msra.mxu0 0.0
    %296 = vmatprep.subr.mxu0 0.0
    %297 = vmatpush2.msra.mxu0 0.0
    %298 = vmatprep.subr.mxu0 0.0
    %299 = vmatpush2.msra.mxu0 0.0
    %300 = vmatprep.subr.mxu0 0.0
    %301 = vmatpush2.msra.mxu0 0.0
    %302 = vmatprep.subr.mxu0 0.0
    %303 = vmatpush2.msra.mxu0 0.0
    %304 = vmatprep.subr.mxu0 0.0
    %305 = vmatpush2.msra.mxu0 0.0
    %306 = vmatprep.subr.mxu0 0.0
    %307 = vmatpush2.msra.mxu0 0.0
    %308 = vmatprep.subr.mxu0 0.0
    %309 = vmatpush2.msra.mxu0 0.0
    %310 = vmatprep.subr.mxu0 0.0
    %311 = vmatpush2.msra.mxu0 0.0
    %312 = vmatprep.mubr.f32.mxu0 0.0
    %313 = vmatmul.mubr.f32.gmra.mxu0 %v246
    %v314 = vpop.f32.mrf.mxu0
    %v315 = vadd.f32 %v243, %v314
    %v316 = vpop.f32.mrf.mxu0
    %317 = vdwg.mxu0
    %vm318 = vcmask 64512
    %319 = vst.msk [vmem:[#allocation7] sm:$0xff] %vm318, %v315
    // Predicated region
    $region38: #{tpu_custom_call.1} parent=1 // pred_check
      _
    $region39: #{tpu_custom_call.1} parent=1 // pred_check_branch
      %321 = sbr.rel (0) target = $region41
    $region40: #{tpu_custom_call.1} parent=1 // pred_region
      %s323 = ssub.s32 128, 128
      %324 = vsyncadd [#allocation4], %s323
      %s326 = sshll.u32 [#allocation7], 4
      %s327 = int_to_ptr.vmem [resolvable:$true] %s326
      %329 = dma.vmem_to_hbm [thread:$0]  %s327, 128, %s7, [#allocation4]
    $region41: #{tpu_custom_call.1} parent=1 // pred_fallthru
      _
    // Predicated region
    $region42: #{tpu_custom_call.1} parent=1 // pred_check
      _
    $region43: #{tpu_custom_call.1} parent=1 // pred_check_branch
      %331 = sbr.rel (0) target = $region45
    $region44: #{tpu_custom_call.1} parent=1 // pred_region
      %332 = dma.done [#allocation4], 128
    $region45: #{tpu_custom_call.1} parent=1 // pred_fallthru
      _
    %333 = vsyncpa [#allocation3], 1
    %334 = vsyncpa [#allocation6], 1
    %335 = vsyncpa [#allocation4], 1

</llo_original>
